<compile_context>
chip_gen: v5e
topology: v5e:2x2
jax: 0.10.0
libtpu: 0.0.40
codegen_flags: <defaults>
</compile_context>

<pallas_src>
import jax
import jax.numpy as jnp
from jax.experimental import pallas as pl
from jax.experimental.pallas import tpu as pltpu

F_PAD = 64         # padded feature count (sublane dim): 50 -> 64
LANE = 128
DEFAULT_TB = 2048  # batch tile (lane dim), multiple of 128


def _round_up(n, m):
    return ((n + m - 1) // m) * m


def _pad2d(a, rows, cols, dtype=jnp.float32):
    a = jnp.asarray(a, jnp.float32)
    out = jnp.zeros((rows, cols), jnp.float32).at[:a.shape[0], :a.shape[1]].set(a)
    return out.astype(dtype)


def _sigmoid(z):
    # Single EUP op (tanh) instead of exp + reciprocal.
    return 0.5 * (jnp.tanh(0.5 * z) + 1.0)


def mlp_kernel(x_ref,
               w1_ref, b1_ref,
               w2_ref, b2_ref,
               w3_ref, b3_ref,
               w4_ref, b4_ref,
               o_ref):
    # x tile: (1, TB) f32 -- batch in lanes.
    x = x_ref[...]

    # Layer 1 (fan_in=1): VPU outer product, no wasted K=1 MXU pass.
    h = _sigmoid(w1_ref[...] * x + b1_ref[...])                 # (F_PAD, TB) f32

    # Layers 2 and 3: (F_PAD, F_PAD) @ (F_PAD, TB) MXU matmuls. Operands are
    # cast to the stored weight dtype (f32 or bf16); accumulation stays f32.
    # Padded weight rows/cols are zero, so padded sublanes stay inert.
    h = jnp.dot(w2_ref[...], h.astype(w2_ref.dtype),
                preferred_element_type=jnp.float32)
    h = _sigmoid(h + b2_ref[...])
    h = jnp.dot(w3_ref[...], h.astype(w3_ref.dtype),
                preferred_element_type=jnp.float32)
    h = _sigmoid(h + b3_ref[...])

    # Layer 4 (fan_out=1): VPU multiply + sublane reduce -> lane-dense (1, TB).
    o_ref[...] = jnp.sum(h * w4_ref[...], axis=0, keepdims=True) + b4_ref[...]


def pack_params(params, use_bf16=False):
    """Pad / re-layout the PyTorch-layout params once; reuse across forwards.

    Batch-in-lanes layout: hidden weights stay (out_features, in_features)
    (no transpose needed), biases become (F_PAD, 1) columns. Padded rows /
    columns are zero, which keeps padded sublanes inert through every layer.

    use_bf16=True stores the two (64, 64) hidden weights in bf16 -- the MXU
    fast path on ALL generations (v5e's MXU is bf16-native too); elementwise
    math and accumulation remain f32.
    """
    (w1, b1), (w2, b2), (w3, b3), (w4, b4) = params
    wdt = jnp.bfloat16 if use_bf16 else jnp.float32
    w1_p = _pad2d(w1, F_PAD, 1)                              # (50, 1) -> (64, 1)
    w2_p = _pad2d(w2, F_PAD, F_PAD, wdt)                     # (50,50) -> (64,64)
    w3_p = _pad2d(w3, F_PAD, F_PAD, wdt)
    w4_p = _pad2d(jnp.asarray(w4).reshape(-1, 1), F_PAD, 1)  # (1,50) -> (64, 1)
    b1_p = _pad2d(jnp.asarray(b1).reshape(-1, 1), F_PAD, 1)
    b2_p = _pad2d(jnp.asarray(b2).reshape(-1, 1), F_PAD, 1)
    b3_p = _pad2d(jnp.asarray(b3).reshape(-1, 1), F_PAD, 1)
    b4_p = jnp.reshape(jnp.asarray(b4, jnp.float32), (1, 1))
    return (w1_p, b1_p, w2_p, b2_p, w3_p, b3_p, w4_p, b4_p)


def simplpe_net_forward(x, packed_params, *, tb=DEFAULT_TB):
    """x: (B, 1) or (B,), any float/int dtype. Returns (B, 1) float32."""
    w1_p, b1_p, w2_p, b2_p, w3_p, b3_p, w4_p, b4_p = packed_params
    x = jnp.asarray(x, jnp.float32)
    if x.ndim == 1:
        x = x[:, None]
    B = x.shape[0]

    # Batch tile: lane-dim tile, multiple of 128, capped at `tb`. For large B
    # (B >= 2*tb) the "parallel" grid has >=2 steps and spans both v7x TCs.
    tb = _round_up(max(tb, LANE), LANE)
    tb_eff = min(tb, _round_up(B, LANE))
    B_pad = _round_up(B, tb_eff)

    # TODO(synk): pad + final slice are wrapper-side XLA ops; for tile-aligned
    # production batch sizes pass x as a (1, B) row directly and drop them.
    x_row = jnp.zeros((1, B_pad), jnp.float32).at[0, :B].set(x[:, 0])

    tiled = pl.BlockSpec((1, tb_eff), lambda i: (0, i))
    resident = lambda shape: pl.BlockSpec(shape, lambda i: (0, 0))

    wbytes = sum(int(a.size) * a.dtype.itemsize
                 for a in (w1_p, b1_p, w2_p, b2_p, w3_p, b3_p, w4_p, b4_p))
    cost = pl.CostEstimate(
        flops=int(4 * B_pad * F_PAD * (F_PAD + 2)),
        transcendentals=int(3 * B_pad * F_PAD),
        bytes_accessed=int(8 * B_pad + wbytes),
    )

    out = pl.pallas_call(
        mlp_kernel,
        out_shape=jax.ShapeDtypeStruct((1, B_pad), jnp.float32),
        grid=(B_pad // tb_eff,),
        in_specs=[
            tiled,                                           # x
            resident((F_PAD, 1)), resident((F_PAD, 1)),      # w1, b1
            resident((F_PAD, F_PAD)), resident((F_PAD, 1)),  # w2, b2
            resident((F_PAD, F_PAD)), resident((F_PAD, 1)),  # w3, b3
            resident((F_PAD, 1)), resident((1, 1)),          # w4, b4
        ],
        out_specs=tiled,
        compiler_params=pltpu.CompilerParams(
            dimension_semantics=("parallel",)),
        cost_estimate=cost,
    )(x_row, w1_p, b1_p, w2_p, b2_p, w3_p, b3_p, w4_p, b4_p)

    return out[0, :B][:, None]


def init_params(key):
    """Deterministic init matching PyTorch nn.Linear default:
    U(-1/sqrt(fan_in), 1/sqrt(fan_in)) for both weight and bias."""
    dims = [(1, 50), (50, 50), (50, 50), (50, 1)]
    params = []
    for (fan_in, fan_out) in dims:
        key, kw, kb = jax.random.split(key, 3)
        bound = 1.0 / jnp.sqrt(jnp.float32(fan_in))
        w = jax.random.uniform(kw, (fan_out, fan_in), jnp.float32, -bound, bound)
        b = jax.random.uniform(kb, (fan_out,), jnp.float32, -bound, bound)
        params.append((w, b))
    return params


def reference_forward(x, params):
    """Plain-JAX reference of the PyTorch forward, for sanity checking."""
    h = jnp.asarray(x, jnp.float32)
    (w1, b1), (w2, b2), (w3, b3), (w4, b4) = params
    h = jax.nn.sigmoid(h @ w1.T + b1)
    h = jax.nn.sigmoid(h @ w2.T + b2)
    h = jax.nn.sigmoid(h @ w3.T + b3)
    return h @ w4.T + b4


if __name__ == "__main__":
    key = jax.random.PRNGKey(0)
    kp, kx = jax.random.split(key)
    params = init_params(kp)
    packed_f32 = pack_params(params, use_bf16=False)

    # Small batch (single grid step, one 128-lane tile).
    B = 8
    x = jax.random.normal(kx, (B, 1), jnp.float32)
    y = jax.block_until_ready(simplpe_net_forward(x, packed_f32))
    y_ref = reference_forward(x, params)
    assert y.shape == (B, 1)
    assert jnp.allclose(y, y_ref, atol=1e-5, rtol=1e-5), "f32 mismatch (B=8)"

    # Larger, non-aligned batch (padded to a 384-lane tile).
    B2 = 300
    x2 = jax.random.normal(kx, (B2, 1), jnp.float32)
    y2 = jax.block_until_ready(simplpe_net_forward(x2, packed_f32))
    y2_ref = reference_forward(x2, params)
    assert y2.shape == (B2, 1)
    assert jnp.allclose(y2, y2_ref, atol=1e-5, rtol=1e-5), "f32 mismatch (B=300)"

    # bf16 matmul-operand fast path (recommended on all gens, incl. v5e);
    # elementwise math stays f32.
    packed_bf16 = pack_params(params, use_bf16=True)
    y3 = jax.block_until_ready(simplpe_net_forward(x2, packed_bf16))
    assert jnp.allclose(y3, y2_ref, atol=5e-2, rtol=5e-2), "bf16 mismatch"

    print("KERNEL_OK")
</pallas_src>

<mosaic_0001>
module attributes {stable_mosaic.version = 11 : i64} {
  func.func @mlp_kernel(%arg0: i32, %arg1: memref<1x128xf32, #tpu.memory_space<vmem>>, %arg2: memref<64x1xf32, #tpu.memory_space<vmem>>, %arg3: memref<64x1xf32, #tpu.memory_space<vmem>>, %arg4: memref<64x64xf32, #tpu.memory_space<vmem>>, %arg5: memref<64x1xf32, #tpu.memory_space<vmem>>, %arg6: memref<64x64xf32, #tpu.memory_space<vmem>>, %arg7: memref<64x1xf32, #tpu.memory_space<vmem>>, %arg8: memref<64x1xf32, #tpu.memory_space<vmem>>, %arg9: memref<1x1xf32, #tpu.memory_space<vmem>>, %arg10: memref<1x128xf32, #tpu.memory_space<vmem>>) attributes {dimension_semantics = [#tpu.dimension_semantics<parallel>], iteration_bounds = array<i64: 1>, scalar_prefetch = 0 : i64, scratch_operands = 0 : i64, tpu.core_type = #tpu.core_type<tc>, window_params = [{transform_indices = @transform_0, window_bounds = array<i64: 1, 128>}, {pipeline_mode = #tpu.pipeline_mode<synchronous>, transform_indices = @transform_1, window_bounds = array<i64: 64, 1>}, {pipeline_mode = #tpu.pipeline_mode<synchronous>, transform_indices = @transform_2, window_bounds = array<i64: 64, 1>}, {pipeline_mode = #tpu.pipeline_mode<synchronous>, transform_indices = @transform_3, window_bounds = array<i64: 64, 64>}, {pipeline_mode = #tpu.pipeline_mode<synchronous>, transform_indices = @transform_4, window_bounds = array<i64: 64, 1>}, {pipeline_mode = #tpu.pipeline_mode<synchronous>, transform_indices = @transform_5, window_bounds = array<i64: 64, 64>}, {pipeline_mode = #tpu.pipeline_mode<synchronous>, transform_indices = @transform_6, window_bounds = array<i64: 64, 1>}, {pipeline_mode = #tpu.pipeline_mode<synchronous>, transform_indices = @transform_7, window_bounds = array<i64: 64, 1>}, {pipeline_mode = #tpu.pipeline_mode<synchronous>, transform_indices = @transform_8, window_bounds = array<i64: 1, 1>}, {transform_indices = @transform_9, window_bounds = array<i64: 1, 128>}]} {
    %c0 = arith.constant 0 : index
    %c0_0 = arith.constant 0 : index
    %0 = vector.load %arg1[%c0, %c0_0] : memref<1x128xf32, #tpu.memory_space<vmem>>, vector<1x128xf32>
    %c0_1 = arith.constant 0 : index
    %c0_2 = arith.constant 0 : index
    %1 = vector.load %arg2[%c0_1, %c0_2] : memref<64x1xf32, #tpu.memory_space<vmem>>, vector<64x1xf32>
    %2 = vector.broadcast %1 : vector<64x1xf32> to vector<64x128xf32>
    %3 = vector.broadcast %0 : vector<1x128xf32> to vector<64x128xf32>
    %4 = arith.mulf %2, %3 : vector<64x128xf32>
    %c0_3 = arith.constant 0 : index
    %c0_4 = arith.constant 0 : index
    %5 = vector.load %arg3[%c0_3, %c0_4] : memref<64x1xf32, #tpu.memory_space<vmem>>, vector<64x1xf32>
    %6 = vector.broadcast %5 : vector<64x1xf32> to vector<64x128xf32>
    %7 = arith.addf %4, %6 : vector<64x128xf32>
    %cst = arith.constant 5.000000e-01 : f32
    %8 = vector.broadcast %cst : f32 to vector<64x128xf32>
    %9 = arith.mulf %8, %7 : vector<64x128xf32>
    %10 = math.tanh %9 : vector<64x128xf32>
    %cst_5 = arith.constant 1.000000e+00 : f32
    %11 = vector.broadcast %cst_5 : f32 to vector<64x128xf32>
    %12 = arith.addf %10, %11 : vector<64x128xf32>
    %cst_6 = arith.constant 5.000000e-01 : f32
    %13 = vector.broadcast %cst_6 : f32 to vector<64x128xf32>
    %14 = arith.mulf %13, %12 : vector<64x128xf32>
    %c0_7 = arith.constant 0 : index
    %c0_8 = arith.constant 0 : index
    %15 = vector.load %arg4[%c0_7, %c0_8] : memref<64x64xf32, #tpu.memory_space<vmem>>, vector<64x64xf32>
    %cst_9 = arith.constant dense<0.000000e+00> : vector<64x128xf32>
    %16 = tpu.matmul %15, %14, %cst_9 {dimension_numbers = #tpu.dot_dimension_numbers<[1], [0], [0], [1], [0, 0, 1, 1], [], []>} : vector<64x64xf32>, vector<64x128xf32>, vector<64x128xf32> -> vector<64x128xf32>
    %c0_10 = arith.constant 0 : index
    %c0_11 = arith.constant 0 : index
    %17 = vector.load %arg5[%c0_10, %c0_11] : memref<64x1xf32, #tpu.memory_space<vmem>>, vector<64x1xf32>
    %18 = vector.broadcast %17 : vector<64x1xf32> to vector<64x128xf32>
    %19 = arith.addf %16, %18 : vector<64x128xf32>
    %cst_12 = arith.constant 5.000000e-01 : f32
    %20 = vector.broadcast %cst_12 : f32 to vector<64x128xf32>
    %21 = arith.mulf %20, %19 : vector<64x128xf32>
    %22 = math.tanh %21 : vector<64x128xf32>
    %cst_13 = arith.constant 1.000000e+00 : f32
    %23 = vector.broadcast %cst_13 : f32 to vector<64x128xf32>
    %24 = arith.addf %22, %23 : vector<64x128xf32>
    %cst_14 = arith.constant 5.000000e-01 : f32
    %25 = vector.broadcast %cst_14 : f32 to vector<64x128xf32>
    %26 = arith.mulf %25, %24 : vector<64x128xf32>
    %c0_15 = arith.constant 0 : index
    %c0_16 = arith.constant 0 : index
    %27 = vector.load %arg6[%c0_15, %c0_16] : memref<64x64xf32, #tpu.memory_space<vmem>>, vector<64x64xf32>
    %cst_17 = arith.constant dense<0.000000e+00> : vector<64x128xf32>
    %28 = tpu.matmul %27, %26, %cst_17 {dimension_numbers = #tpu.dot_dimension_numbers<[1], [0], [0], [1], [0, 0, 1, 1], [], []>} : vector<64x64xf32>, vector<64x128xf32>, vector<64x128xf32> -> vector<64x128xf32>
    %c0_18 = arith.constant 0 : index
    %c0_19 = arith.constant 0 : index
    %29 = vector.load %arg7[%c0_18, %c0_19] : memref<64x1xf32, #tpu.memory_space<vmem>>, vector<64x1xf32>
    %30 = vector.broadcast %29 : vector<64x1xf32> to vector<64x128xf32>
    %31 = arith.addf %28, %30 : vector<64x128xf32>
    %cst_20 = arith.constant 5.000000e-01 : f32
    %32 = vector.broadcast %cst_20 : f32 to vector<64x128xf32>
    %33 = arith.mulf %32, %31 : vector<64x128xf32>
    %34 = math.tanh %33 : vector<64x128xf32>
    %cst_21 = arith.constant 1.000000e+00 : f32
    %35 = vector.broadcast %cst_21 : f32 to vector<64x128xf32>
    %36 = arith.addf %34, %35 : vector<64x128xf32>
    %cst_22 = arith.constant 5.000000e-01 : f32
    %37 = vector.broadcast %cst_22 : f32 to vector<64x128xf32>
    %38 = arith.mulf %37, %36 : vector<64x128xf32>
    %c0_23 = arith.constant 0 : index
    %c0_24 = arith.constant 0 : index
    %39 = vector.load %arg8[%c0_23, %c0_24] : memref<64x1xf32, #tpu.memory_space<vmem>>, vector<64x1xf32>
    %40 = vector.broadcast %39 : vector<64x1xf32> to vector<64x128xf32>
    %41 = arith.mulf %38, %40 : vector<64x128xf32>
    %cst_25 = arith.constant dense<0.000000e+00> : vector<128xf32>
    %42 = vector.multi_reduction <add>, %41, %cst_25 [0] : vector<64x128xf32> to vector<128xf32>
    %43 = vector.shape_cast %42 : vector<128xf32> to vector<1x128xf32>
    %c0_26 = arith.constant 0 : index
    %c0_27 = arith.constant 0 : index
    %44 = vector.load %arg9[%c0_26, %c0_27] : memref<1x1xf32, #tpu.memory_space<vmem>>, vector<1x1xf32>
    %45 = vector.broadcast %44 : vector<1x1xf32> to vector<1x128xf32>
    %46 = arith.addf %43, %45 : vector<1x128xf32>
    %c0_28 = arith.constant 0 : index
    %c0_29 = arith.constant 0 : index
    %47 = vector.load %arg10[%c0_28, %c0_29] : memref<1x128xf32, #tpu.memory_space<vmem>>, vector<1x128xf32>
    tpu.vector_store %arg10[%c0_28, %c0_29], %46 {strides = array<i32>} : memref<1x128xf32, #tpu.memory_space<vmem>>, vector<1x128xf32>,
    return
  }
  func.func @transform_0(%arg0: i32) -> (i32, i32) {
    %c0_i32 = arith.constant 0 : i32
    %c0_i32_0 = arith.constant 0 : i32
    return %c0_i32, %arg0 : i32, i32
  }
  func.func @transform_1(%arg0: i32) -> (i32, i32) {
    %c0_i32 = arith.constant 0 : i32
    %c0_i32_0 = arith.constant 0 : i32
    %c0_i32_1 = arith.constant 0 : i32
    return %c0_i32, %c0_i32_0 : i32, i32
  }
  func.func @transform_2(%arg0: i32) -> (i32, i32) {
    %c0_i32 = arith.constant 0 : i32
    %c0_i32_0 = arith.constant 0 : i32
    %c0_i32_1 = arith.constant 0 : i32
    return %c0_i32, %c0_i32_0 : i32, i32
  }
  func.func @transform_3(%arg0: i32) -> (i32, i32) {
    %c0_i32 = arith.constant 0 : i32
    %c0_i32_0 = arith.constant 0 : i32
    %c0_i32_1 = arith.constant 0 : i32
    return %c0_i32, %c0_i32_0 : i32, i32
  }
  func.func @transform_4(%arg0: i32) -> (i32, i32) {
    %c0_i32 = arith.constant 0 : i32
    %c0_i32_0 = arith.constant 0 : i32
    %c0_i32_1 = arith.constant 0 : i32
    return %c0_i32, %c0_i32_0 : i32, i32
  }
  func.func @transform_5(%arg0: i32) -> (i32, i32) {
    %c0_i32 = arith.constant 0 : i32
    %c0_i32_0 = arith.constant 0 : i32
    %c0_i32_1 = arith.constant 0 : i32
    return %c0_i32, %c0_i32_0 : i32, i32
  }
  func.func @transform_6(%arg0: i32) -> (i32, i32) {
    %c0_i32 = arith.constant 0 : i32
    %c0_i32_0 = arith.constant 0 : i32
    %c0_i32_1 = arith.constant 0 : i32
    return %c0_i32, %c0_i32_0 : i32, i32
  }
  func.func @transform_7(%arg0: i32) -> (i32, i32) {
    %c0_i32 = arith.constant 0 : i32
    %c0_i32_0 = arith.constant 0 : i32
    %c0_i32_1 = arith.constant 0 : i32
    return %c0_i32, %c0_i32_0 : i32, i32
  }
  func.func @transform_8(%arg0: i32) -> (i32, i32) {
    %c0_i32 = arith.constant 0 : i32
    %c0_i32_0 = arith.constant 0 : i32
    %c0_i32_1 = arith.constant 0 : i32
    return %c0_i32, %c0_i32_0 : i32, i32
  }
  func.func @transform_9(%arg0: i32) -> (i32, i32) {
    %c0_i32 = arith.constant 0 : i32
    %c0_i32_0 = arith.constant 0 : i32
    return %c0_i32, %arg0 : i32, i32
  }
}

</mosaic_0001>

<llo_original>
// kernel: tpu_custom_call.1
$region0: #{tpu_custom_call.1}
  #allocation0 [shape = 'u32[]', space=smem, size = 0x4, offset = 0x4, fixed_abs, tag = 'smem constant byte address 0x4 - core index']
  #allocation1 [shape = 'u32[72,128]{1,0:T(1,128)}', space=vmem, size = 0x9000, scoped, tag = 'internal scratch']
  #allocation2 [shape = 'f32[1,1]{1,0:T(1,128)S(1)}', space=vmem, size = 0x200, scoped, tag = 'scoped memory for tpu_custom_call.1']
  %s0 = inlined_call_operand.vmem [shape: f32[1,128], index: 0, kind: input, shape index: {}]
  %s1 = inlined_call_operand.vmem [shape: f32[64,1], index: 1, kind: input, shape index: {}]
  %s2 = inlined_call_operand.vmem [shape: f32[64,1], index: 2, kind: input, shape index: {}]
  %s3 = inlined_call_operand.vmem [shape: f32[64,64], index: 3, kind: input, shape index: {}]
  %s4 = inlined_call_operand.vmem [shape: f32[64,1], index: 4, kind: input, shape index: {}]
  %s5 = inlined_call_operand.vmem [shape: f32[64,64], index: 5, kind: input, shape index: {}]
  %s6 = inlined_call_operand.vmem [shape: f32[64,1], index: 6, kind: input, shape index: {}]
  %s7 = inlined_call_operand.vmem [shape: f32[64,1], index: 7, kind: input, shape index: {}]
  %s8 = inlined_call_operand.<no memory space> [shape: f32[1,1], index: 8, kind: input, shape index: {}]
  %s9 = inlined_call_operand.hbm [shape: f32[1,128], index: 9, kind: output, shape index: {}]
  %s10 = sld [smem:[#allocation0]]
  $region46: #{tpu_custom_call.1} parent=0
    _
  %s12 = ssub.s32 1, %s10
  %s13 = scalar_select 0, %s12, %s10
  %v14 = vstv %s8
  %15 = vst [vmem:[#allocation2] sm:$0x1] %v14
  $region1: #{tpu_custom_call.1} parent=0
    #allocation3 [shape = 'u8[512]{0}', space=vmem, size = 0x400, scoped, tag = 'output window, operand 0, single buffered']
    #allocation4 [shape = 's32[1]{0}', space=sflag, size = 0x4, scoped, tag = 'scoped memory for tpu_custom_call.1']
    %16 = vsyncpa [#allocation4], 0
    // Predicated region
    $region2: #{tpu_custom_call.1} parent=1 // pred_check
      _
    $region3: #{tpu_custom_call.1} parent=1 // pred_check_branch
      %18 = sbr.rel (0) target = $region5
    $region4: #{tpu_custom_call.1} parent=1 // pred_region
      _
    $region5: #{tpu_custom_call.1} parent=1 // pred_fallthru
      _
    // Predicated region
    $region6: #{tpu_custom_call.1} parent=1 // pred_check
      _
    $region7: #{tpu_custom_call.1} parent=1 // pred_check_branch
      %20 = sbr.rel (0) target = $region9
    $region8: #{tpu_custom_call.1} parent=1 // pred_region
      _
    $region9: #{tpu_custom_call.1} parent=1 // pred_fallthru
      _
    // Predicated region
    $region10: #{tpu_custom_call.1} parent=1 // pred_check
      _
    $region11: #{tpu_custom_call.1} parent=1 // pred_check_branch
      %22 = sbr.rel (0) target = $region13
    $region12: #{tpu_custom_call.1} parent=1 // pred_region
      _
    $region13: #{tpu_custom_call.1} parent=1 // pred_fallthru
      _
    // Predicated region
    $region14: #{tpu_custom_call.1} parent=1 // pred_check
      _
    $region15: #{tpu_custom_call.1} parent=1 // pred_check_branch
      %24 = sbr.rel (0) target = $region17
    $region16: #{tpu_custom_call.1} parent=1 // pred_region
      _
    $region17: #{tpu_custom_call.1} parent=1 // pred_fallthru
      _
    // Predicated region
    $region18: #{tpu_custom_call.1} parent=1 // pred_check
      _
    $region19: #{tpu_custom_call.1} parent=1 // pred_check_branch
      %26 = sbr.rel (0) target = $region21
    $region20: #{tpu_custom_call.1} parent=1 // pred_region
      _
    $region21: #{tpu_custom_call.1} parent=1 // pred_fallthru
      _
    // Predicated region
    $region22: #{tpu_custom_call.1} parent=1 // pred_check
      _
    $region23: #{tpu_custom_call.1} parent=1 // pred_check_branch
      %28 = sbr.rel (0) target = $region25
    $region24: #{tpu_custom_call.1} parent=1 // pred_region
      _
    $region25: #{tpu_custom_call.1} parent=1 // pred_fallthru
      _
    // Predicated region
    $region26: #{tpu_custom_call.1} parent=1 // pred_check
      _
    $region27: #{tpu_custom_call.1} parent=1 // pred_check_branch
      %30 = sbr.rel (0) target = $region29
    $region28: #{tpu_custom_call.1} parent=1 // pred_region
      _
    $region29: #{tpu_custom_call.1} parent=1 // pred_fallthru
      _
    // Predicated region
    $region30: #{tpu_custom_call.1} parent=1 // pred_check
      _
    $region31: #{tpu_custom_call.1} parent=1 // pred_check_branch
      %32 = sbr.rel (0) target = $region33
    $region32: #{tpu_custom_call.1} parent=1 // pred_region
      _
    $region33: #{tpu_custom_call.1} parent=1 // pred_fallthru
      _
    // Predicated region
    $region34: #{tpu_custom_call.1} parent=1 // pred_check
      _
    $region35: #{tpu_custom_call.1} parent=1 // pred_check_branch
      %34 = sbr.rel (0) target = $region37
    $region36: #{tpu_custom_call.1} parent=1 // pred_region
      _
    $region37: #{tpu_custom_call.1} parent=1 // pred_fallthru
      _
    %v35 = vld [vmem:[%s0] sm:$0x1]
    %v36 = vld [vmem:[%s1] sm:$0xff]
    %v37 = vld [vmem:[%s1 + $0x8] sm:$0xff]
    %v38 = vld [vmem:[%s1 + $0x10] sm:$0xff]
    %v39 = vld [vmem:[%s1 + $0x18] sm:$0xff]
    %v40 = vld [vmem:[%s1 + $0x20] sm:$0xff]
    %v41 = vld [vmem:[%s1 + $0x28] sm:$0xff]
    %v42 = vld [vmem:[%s1 + $0x30] sm:$0xff]
    %v43 = vld [vmem:[%s1 + $0x38] sm:$0xff]
    %45 = vset.pattern.permute.xlu0 0
    %46 = vperm.xlu0 %45, %v36
    %v47 = vpop.permute.xlu0 %46
    %50 = vset.pattern.permute.xlu0 0
    %51 = vperm.xlu0 %50, %v37
    %v52 = vpop.permute.xlu0 %51
    %55 = vset.pattern.permute.xlu0 0
    %56 = vperm.xlu0 %55, %v38
    %v57 = vpop.permute.xlu0 %56
    %60 = vset.pattern.permute.xlu0 0
    %61 = vperm.xlu0 %60, %v39
    %v62 = vpop.permute.xlu0 %61
    %65 = vset.pattern.permute.xlu0 0
    %66 = vperm.xlu0 %65, %v40
    %v67 = vpop.permute.xlu0 %66
    %70 = vset.pattern.permute.xlu0 0
    %71 = vperm.xlu0 %70, %v41
    %v72 = vpop.permute.xlu0 %71
    %75 = vset.pattern.permute.xlu0 0
    %76 = vperm.xlu0 %75, %v42
    %v77 = vpop.permute.xlu0 %76
    %80 = vset.pattern.permute.xlu0 0
    %81 = vperm.xlu0 %80, %v43
    %v82 = vpop.permute.xlu0 %81
    %v85 = vperm.slane %v35, 0
    %v87 = vmul.f32 %v47, %v85
    %v88 = vmul.f32 %v52, %v85
    %v89 = vmul.f32 %v57, %v85
    %v90 = vmul.f32 %v62, %v85
    %v91 = vmul.f32 %v67, %v85
    %v92 = vmul.f32 %v72, %v85
    %v93 = vmul.f32 %v77, %v85
    %v94 = vmul.f32 %v82, %v85
    %v95 = vld [vmem:[%s2] sm:$0xff]
    %v96 = vld [vmem:[%s2 + $0x8] sm:$0xff]
    %v97 = vld [vmem:[%s2 + $0x10] sm:$0xff]
    %v98 = vld [vmem:[%s2 + $0x18] sm:$0xff]
    %v99 = vld [vmem:[%s2 + $0x20] sm:$0xff]
    %v100 = vld [vmem:[%s2 + $0x28] sm:$0xff]
    %v101 = vld [vmem:[%s2 + $0x30] sm:$0xff]
    %v102 = vld [vmem:[%s2 + $0x38] sm:$0xff]
    %104 = vset.pattern.permute.xlu0 0
    %105 = vperm.xlu0 %104, %v95
    %v106 = vpop.permute.xlu0 %105
    %109 = vset.pattern.permute.xlu0 0
    %110 = vperm.xlu0 %109, %v96
    %v111 = vpop.permute.xlu0 %110
    %114 = vset.pattern.permute.xlu0 0
    %115 = vperm.xlu0 %114, %v97
    %v116 = vpop.permute.xlu0 %115
    %119 = vset.pattern.permute.xlu0 0
    %120 = vperm.xlu0 %119, %v98
    %v121 = vpop.permute.xlu0 %120
    %124 = vset.pattern.permute.xlu0 0
    %125 = vperm.xlu0 %124, %v99
    %v126 = vpop.permute.xlu0 %125
    %129 = vset.pattern.permute.xlu0 0
    %130 = vperm.xlu0 %129, %v100
    %v131 = vpop.permute.xlu0 %130
    %134 = vset.pattern.permute.xlu0 0
    %135 = vperm.xlu0 %134, %v101
    %v136 = vpop.permute.xlu0 %135
    %139 = vset.pattern.permute.xlu0 0
    %140 = vperm.xlu0 %139, %v102
    %v141 = vpop.permute.xlu0 %140
    %v143 = vadd.f32 %v87, %v106
    %v144 = vadd.f32 %v88, %v111
    %v145 = vadd.f32 %v89, %v116
    %v146 = vadd.f32 %v90, %v121
    %v147 = vadd.f32 %v91, %v126
    %v148 = vadd.f32 %v92, %v131
    %v149 = vadd.f32 %v93, %v136
    %v150 = vadd.f32 %v94, %v141
    %v151 = vmul.f32 %v143, 0.5
    %v152 = vmul.f32 %v144, 0.5
    %v153 = vmul.f32 %v145, 0.5
    %v154 = vmul.f32 %v146, 0.5
    %v155 = vmul.f32 %v147, 0.5
    %v156 = vmul.f32 %v148, 0.5
    %v157 = vmul.f32 %v149, 0.5
    %v158 = vmul.f32 %v150, 0.5
    %v159 = vtanh.pop %v151
    %v160 = vtanh.pop %v152
    %v161 = vtanh.pop %v153
    %v162 = vtanh.pop %v154
    %v163 = vtanh.pop %v155
    %v164 = vtanh.pop %v156
    %v165 = vtanh.pop %v157
    %v166 = vtanh.pop %v158
    %v167 = vadd.f32 %v159, 1.0
    %v168 = vadd.f32 %v160, 1.0
    %v169 = vadd.f32 %v161, 1.0
    %v170 = vadd.f32 %v162, 1.0
    %v171 = vadd.f32 %v163, 1.0
    %v172 = vadd.f32 %v164, 1.0
    %v173 = vadd.f32 %v165, 1.0
    %v174 = vadd.f32 %v166, 1.0
    %v175 = vmul.f32 %v167, 0.5
    %v176 = vmul.f32 %v168, 0.5
    %v177 = vmul.f32 %v169, 0.5
    %v178 = vmul.f32 %v170, 0.5
    %v179 = vmul.f32 %v171, 0.5
    %v180 = vmul.f32 %v172, 0.5
    %v181 = vmul.f32 %v173, 0.5
    %v182 = vmul.f32 %v174, 0.5
    %v183 = vld [vmem:[%s3] sm:$0xff]
    %v184 = vld [vmem:[%s3 + $0x8] sm:$0xff]
    %v185 = vld [vmem:[%s3 + $0x10] sm:$0xff]
    %v186 = vld [vmem:[%s3 + $0x18] sm:$0xff]
    %v187 = vld [vmem:[%s3 + $0x20] sm:$0xff]
    %v188 = vld [vmem:[%s3 + $0x28] sm:$0xff]
    %v189 = vld [vmem:[%s3 + $0x30] sm:$0xff]
    %v190 = vld [vmem:[%s3 + $0x38] sm:$0xff]
    %v191 = vld [vmem:[%s4] sm:$0xff]
    %v192 = vld [vmem:[%s4 + $0x8] sm:$0xff]
    %v193 = vld [vmem:[%s4 + $0x10] sm:$0xff]
    %v194 = vld [vmem:[%s4 + $0x18] sm:$0xff]
    %v195 = vld [vmem:[%s4 + $0x20] sm:$0xff]
    %v196 = vld [vmem:[%s4 + $0x28] sm:$0xff]
    %v197 = vld [vmem:[%s4 + $0x30] sm:$0xff]
    %v198 = vld [vmem:[%s4 + $0x38] sm:$0xff]
    %200 = vset.pattern.permute.xlu0 0
    %201 = vperm.xlu0 %200, %v191
    %v202 = vpop.permute.xlu0 %201
    %205 = vset.pattern.permute.xlu0 0
    %206 = vperm.xlu0 %205, %v192
    %v207 = vpop.permute.xlu0 %206
    %210 = vset.pattern.permute.xlu0 0
    %211 = vperm.xlu0 %210, %v193
    %v212 = vpop.permute.xlu0 %211
    %215 = vset.pattern.permute.xlu0 0
    %216 = vperm.xlu0 %215, %v194
    %v217 = vpop.permute.xlu0 %216
    %220 = vset.pattern.permute.xlu0 0
    %221 = vperm.xlu0 %220, %v195
    %v222 = vpop.permute.xlu0 %221
    %225 = vset.pattern.permute.xlu0 0
    %226 = vperm.xlu0 %225, %v196
    %v227 = vpop.permute.xlu0 %226
    %230 = vset.pattern.permute.xlu0 0
    %231 = vperm.xlu0 %230, %v197
    %v232 = vpop.permute.xlu0 %231
    %235 = vset.pattern.permute.xlu0 0
    %236 = vperm.xlu0 %235, %v198
    %v237 = vpop.permute.xlu0 %236
    %vm239 = vcmask 523264
    %v241 = vsel %vm239, %v183, 0
    %v244 = vsel %vm239, %v184, 0
    %v247 = vsel %vm239, %v185, 0
    %v250 = vsel %vm239, %v186, 0
    %v253 = vsel %vm239, %v187, 0
    %v256 = vsel %vm239, %v188, 0
    %v259 = vsel %vm239, %v189, 0
    %v262 = vsel %vm239, %v190, 0
    %264 = vmatpush.msra.mxu0 0.0
    %265 = vmatpush.msra.mxu0 0.0
    %266 = vmatpush.msra.mxu0 0.0
    %267 = vmatpush.msra.mxu0 0.0
    %268 = vmatpush.msra.mxu0 0.0
    %269 = vmatpush.msra.mxu0 0.0
    %270 = vmatpush.msra.mxu0 0.0
    %271 = vmatpush.msra.mxu0 0.0
    %272 = vmatpush.msra.mxu0 %v182
    %273 = vmatpush.msra.mxu0 %v181
    %274 = vmatpush.msra.mxu0 %v180
    %275 = vmatpush.msra.mxu0 %v179
    %276 = vmatpush.msra.mxu0 %v178
    %277 = vmatpush.msra.mxu0 %v177
    %278 = vmatpush.msra.mxu0 %v176
    %279 = vmatpush.msra.mxu0 %v175
    %280 = vmatmul.f32.gmra.mxu0 %v241
    %v281 = vpop.f32.mrf.mxu0
    %v282 = vadd.f32 %v202, %v281
    %283 = vmatmul.f32.gmra.mxu0 %v244
    %v284 = vpop.f32.mrf.mxu0
    %v285 = vadd.f32 %v207, %v284
    %286 = vmatmul.f32.gmra.mxu0 %v247
    %v287 = vpop.f32.mrf.mxu0
    %v288 = vadd.f32 %v212, %v287
    %289 = vmatmul.f32.gmra.mxu0 %v250
    %v290 = vpop.f32.mrf.mxu0
    %v291 = vadd.f32 %v217, %v290
    %292 = vmatmul.f32.gmra.mxu0 %v253
    %v293 = vpop.f32.mrf.mxu0
    %v294 = vadd.f32 %v222, %v293
    %295 = vmatmul.f32.gmra.mxu0 %v256
    %v296 = vpop.f32.mrf.mxu0
    %v297 = vadd.f32 %v227, %v296
    %298 = vmatmul.f32.gmra.mxu0 %v259
    %v299 = vpop.f32.mrf.mxu0
    %v300 = vadd.f32 %v232, %v299
    %301 = vmatmul.f32.gmra.mxu0 %v262
    %v302 = vpop.f32.mrf.mxu0
    %v303 = vadd.f32 %v237, %v302
    %304 = vdwg.mxu0
    %v305 = vmul.f32 %v282, 0.5
    %v306 = vmul.f32 %v285, 0.5
    %v307 = vmul.f32 %v288, 0.5
    %v308 = vmul.f32 %v291, 0.5
    %v309 = vmul.f32 %v294, 0.5
    %v310 = vmul.f32 %v297, 0.5
    %v311 = vmul.f32 %v300, 0.5
    %v312 = vmul.f32 %v303, 0.5
    %v313 = vtanh.pop %v305
    %v314 = vtanh.pop %v306
    %v315 = vtanh.pop %v307
    %v316 = vtanh.pop %v308
    %v317 = vtanh.pop %v309
    %v318 = vtanh.pop %v310
    %v319 = vtanh.pop %v311
    %v320 = vtanh.pop %v312
    %v321 = vadd.f32 %v313, 1.0
    %v322 = vadd.f32 %v314, 1.0
    %v323 = vadd.f32 %v315, 1.0
    %v324 = vadd.f32 %v316, 1.0
    %v325 = vadd.f32 %v317, 1.0
    %v326 = vadd.f32 %v318, 1.0
    %v327 = vadd.f32 %v319, 1.0
    %v328 = vadd.f32 %v320, 1.0
    %v329 = vmul.f32 %v321, 0.5
    %v330 = vmul.f32 %v322, 0.5
    %v331 = vmul.f32 %v323, 0.5
    %v332 = vmul.f32 %v324, 0.5
    %v333 = vmul.f32 %v325, 0.5
    %v334 = vmul.f32 %v326, 0.5
    %v335 = vmul.f32 %v327, 0.5
    %v336 = vmul.f32 %v328, 0.5
    %v337 = vld [vmem:[%s5] sm:$0xff]
    %v338 = vld [vmem:[%s5 + $0x8] sm:$0xff]
    %v339 = vld [vmem:[%s5 + $0x10] sm:$0xff]
    %v340 = vld [vmem:[%s5 + $0x18] sm:$0xff]
    %v341 = vld [vmem:[%s5 + $0x20] sm:$0xff]
    %v342 = vld [vmem:[%s5 + $0x28] sm:$0xff]
    %v343 = vld [vmem:[%s5 + $0x30] sm:$0xff]
    %v344 = vld [vmem:[%s5 + $0x38] sm:$0xff]
    %v345 = vld [vmem:[%s6] sm:$0xff]
    %v346 = vld [vmem:[%s6 + $0x8] sm:$0xff]
    %v347 = vld [vmem:[%s6 + $0x10] sm:$0xff]
    %v348 = vld [vmem:[%s6 + $0x18] sm:$0xff]
    %v349 = vld [vmem:[%s6 + $0x20] sm:$0xff]
    %v350 = vld [vmem:[%s6 + $0x28] sm:$0xff]
    %v351 = vld [vmem:[%s6 + $0x30] sm:$0xff]
    %v352 = vld [vmem:[%s6 + $0x38] sm:$0xff]
    %354 = vset.pattern.permute.xlu0 0
    %355 = vperm.xlu0 %354, %v345
    %v356 = vpop.permute.xlu0 %355
    %359 = vset.pattern.permute.xlu0 0
    %360 = vperm.xlu0 %359, %v346
    %v361 = vpop.permute.xlu0 %360
    %364 = vset.pattern.permute.xlu0 0
    %365 = vperm.xlu0 %364, %v347
    %v366 = vpop.permute.xlu0 %365
    %369 = vset.pattern.permute.xlu0 0
    %370 = vperm.xlu0 %369, %v348
    %v371 = vpop.permute.xlu0 %370
    %374 = vset.pattern.permute.xlu0 0
    %375 = vperm.xlu0 %374, %v349
    %v376 = vpop.permute.xlu0 %375
    %379 = vset.pattern.permute.xlu0 0
    %380 = vperm.xlu0 %379, %v350
    %v381 = vpop.permute.xlu0 %380
    %384 = vset.pattern.permute.xlu0 0
    %385 = vperm.xlu0 %384, %v351
    %v386 = vpop.permute.xlu0 %385
    %389 = vset.pattern.permute.xlu0 0
    %390 = vperm.xlu0 %389, %v352
    %v391 = vpop.permute.xlu0 %390
    %v394 = vsel %vm239, %v337, 0
    %v397 = vsel %vm239, %v338, 0
    %v400 = vsel %vm239, %v339, 0
    %v403 = vsel %vm239, %v340, 0
    %v406 = vsel %vm239, %v341, 0
    %v409 = vsel %vm239, %v342, 0
    %v412 = vsel %vm239, %v343, 0
    %v415 = vsel %vm239, %v344, 0
    %417 = vmatpush.msra.mxu0 0.0
    %418 = vmatpush.msra.mxu0 0.0
    %419 = vmatpush.msra.mxu0 0.0
    %420 = vmatpush.msra.mxu0 0.0
    %421 = vmatpush.msra.mxu0 0.0
    %422 = vmatpush.msra.mxu0 0.0
    %423 = vmatpush.msra.mxu0 0.0
    %424 = vmatpush.msra.mxu0 0.0
    %425 = vmatpush.msra.mxu0 %v336
    %426 = vmatpush.msra.mxu0 %v335
    %427 = vmatpush.msra.mxu0 %v334
    %428 = vmatpush.msra.mxu0 %v333
    %429 = vmatpush.msra.mxu0 %v332
    %430 = vmatpush.msra.mxu0 %v331
    %431 = vmatpush.msra.mxu0 %v330
    %432 = vmatpush.msra.mxu0 %v329
    %433 = vmatmul.f32.gmra.mxu0 %v394
    %v434 = vpop.f32.mrf.mxu0
    %v435 = vadd.f32 %v356, %v434
    %436 = vmatmul.f32.gmra.mxu0 %v397
    %v437 = vpop.f32.mrf.mxu0
    %v438 = vadd.f32 %v361, %v437
    %439 = vmatmul.f32.gmra.mxu0 %v400
    %v440 = vpop.f32.mrf.mxu0
    %v441 = vadd.f32 %v366, %v440
    %442 = vmatmul.f32.gmra.mxu0 %v403
    %v443 = vpop.f32.mrf.mxu0
    %v444 = vadd.f32 %v371, %v443
    %445 = vmatmul.f32.gmra.mxu0 %v406
    %v446 = vpop.f32.mrf.mxu0
    %v447 = vadd.f32 %v376, %v446
    %448 = vmatmul.f32.gmra.mxu0 %v409
    %v449 = vpop.f32.mrf.mxu0
    %v450 = vadd.f32 %v381, %v449
    %451 = vmatmul.f32.gmra.mxu0 %v412
    %v452 = vpop.f32.mrf.mxu0
    %v453 = vadd.f32 %v386, %v452
    %454 = vmatmul.f32.gmra.mxu0 %v415
    %v455 = vpop.f32.mrf.mxu0
    %v456 = vadd.f32 %v391, %v455
    %457 = vdwg.mxu0
    %v458 = vmul.f32 %v435, 0.5
    %v459 = vmul.f32 %v438, 0.5
    %v460 = vmul.f32 %v441, 0.5
    %v461 = vmul.f32 %v444, 0.5
    %v462 = vmul.f32 %v447, 0.5
    %v463 = vmul.f32 %v450, 0.5
    %v464 = vmul.f32 %v453, 0.5
    %v465 = vmul.f32 %v456, 0.5
    %v466 = vtanh.pop %v458
    %v467 = vtanh.pop %v459
    %v468 = vtanh.pop %v460
    %v469 = vtanh.pop %v461
    %v470 = vtanh.pop %v462
    %v471 = vtanh.pop %v463
    %v472 = vtanh.pop %v464
    %v473 = vtanh.pop %v465
    %v474 = vadd.f32 %v466, 1.0
    %v475 = vadd.f32 %v467, 1.0
    %v476 = vadd.f32 %v468, 1.0
    %v477 = vadd.f32 %v469, 1.0
    %v478 = vadd.f32 %v470, 1.0
    %v479 = vadd.f32 %v471, 1.0
    %v480 = vadd.f32 %v472, 1.0
    %v481 = vadd.f32 %v473, 1.0
    %v482 = vmul.f32 %v474, 0.5
    %v483 = vmul.f32 %v475, 0.5
    %v484 = vmul.f32 %v476, 0.5
    %v485 = vmul.f32 %v477, 0.5
    %v486 = vmul.f32 %v478, 0.5
    %v487 = vmul.f32 %v479, 0.5
    %v488 = vmul.f32 %v480, 0.5
    %v489 = vmul.f32 %v481, 0.5
    %v490 = vld [vmem:[%s7] sm:$0xff]
    %v491 = vld [vmem:[%s7 + $0x8] sm:$0xff]
    %v492 = vld [vmem:[%s7 + $0x10] sm:$0xff]
    %v493 = vld [vmem:[%s7 + $0x18] sm:$0xff]
    %v494 = vld [vmem:[%s7 + $0x20] sm:$0xff]
    %v495 = vld [vmem:[%s7 + $0x28] sm:$0xff]
    %v496 = vld [vmem:[%s7 + $0x30] sm:$0xff]
    %v497 = vld [vmem:[%s7 + $0x38] sm:$0xff]
    %499 = vset.pattern.permute.xlu0 0
    %500 = vperm.xlu0 %499, %v490
    %v501 = vpop.permute.xlu0 %500
    %504 = vset.pattern.permute.xlu0 0
    %505 = vperm.xlu0 %504, %v491
    %v506 = vpop.permute.xlu0 %505
    %509 = vset.pattern.permute.xlu0 0
    %510 = vperm.xlu0 %509, %v492
    %v511 = vpop.permute.xlu0 %510
    %514 = vset.pattern.permute.xlu0 0
    %515 = vperm.xlu0 %514, %v493
    %v516 = vpop.permute.xlu0 %515
    %519 = vset.pattern.permute.xlu0 0
    %520 = vperm.xlu0 %519, %v494
    %v521 = vpop.permute.xlu0 %520
    %524 = vset.pattern.permute.xlu0 0
    %525 = vperm.xlu0 %524, %v495
    %v526 = vpop.permute.xlu0 %525
    %529 = vset.pattern.permute.xlu0 0
    %530 = vperm.xlu0 %529, %v496
    %v531 = vpop.permute.xlu0 %530
    %534 = vset.pattern.permute.xlu0 0
    %535 = vperm.xlu0 %534, %v497
    %v536 = vpop.permute.xlu0 %535
    %v538 = vmul.f32 %v482, %v501
    %v539 = vmul.f32 %v483, %v506
    %v540 = vmul.f32 %v484, %v511
    %v541 = vmul.f32 %v485, %v516
    %v542 = vmul.f32 %v486, %v521
    %v543 = vmul.f32 %v487, %v526
    %v544 = vmul.f32 %v488, %v531
    %v545 = vmul.f32 %v489, %v536
    %v546 = vadd.f32 %v538, %v539
    %v547 = vadd.f32 %v546, %v540
    %v548 = vadd.f32 %v547, %v541
    %v549 = vadd.f32 %v548, %v542
    %v550 = vadd.f32 %v549, %v543
    %v551 = vadd.f32 %v550, %v544
    %v552 = vadd.f32 %v551, %v545
    %v553 = vrot.slane %v552, 4
    %v554 = vadd.f32 %v552, %v553
    %v555 = vrot.slane %v554, 2
    %v556 = vadd.f32 %v554, %v555
    %v557 = vrot.slane %v556, 1
    %v558 = vadd.f32 %v556, %v557
    %v559 = vld [vmem:[#allocation2] sm:$0x1]
    %561 = vset.pattern.permute.xlu0 0
    %562 = vperm.xlu0 %561, %v559
    %v563 = vpop.permute.xlu0 %562
    %v565 = vperm.slane %v563, 0
    %v566 = vadd.f32 %v558, %v565
    %567 = vst [vmem:[#allocation3] sm:$0x1] %v566
    // Predicated region
    $region38: #{tpu_custom_call.1} parent=1 // pred_check
      _
    $region39: #{tpu_custom_call.1} parent=1 // pred_check_branch
      %569 = sbr.rel (0) target = $region41
    $region40: #{tpu_custom_call.1} parent=1 // pred_region
      %571 = vsyncadd [#allocation4], 0
      %s573 = sshll.u32 [#allocation3], 4
      %s574 = int_to_ptr.vmem [resolvable:$true] %s573
      %s575 = sshll.u32 %s9, 4
      %s576 = int_to_ptr.hbm [resolvable:$true] %s575
      %578 = dma.vmem_to_hbm [thread:$0]  %s574, 16, %s576, [#allocation4]
    $region41: #{tpu_custom_call.1} parent=1 // pred_fallthru
      _
    // Predicated region
    $region42: #{tpu_custom_call.1} parent=1 // pred_check
      _
    $region43: #{tpu_custom_call.1} parent=1 // pred_check_branch
      %580 = sbr.rel (0) target = $region45
    $region44: #{tpu_custom_call.1} parent=1 // pred_region
      %582 = dma.done [#allocation4], 16
    $region45: #{tpu_custom_call.1} parent=1 // pred_fallthru
      _
    %583 = vsyncpa [#allocation4], 1

</llo_original>
